<compile_context>
chip_gen: v5e
topology: v5e:2x2
jax: 0.10.0
libtpu: 0.0.40
codegen_flags: <defaults>
</compile_context>

<pallas_src>
import functools

import jax
import jax.numpy as jnp
from jax import lax
from jax.experimental import pallas as pl
from jax.experimental.pallas import tpu as pltpu

_TM_MAX = 512  # row-tile cap; fits comfortably in VMEM on v5e/v6e/v7x


def _gaussian_mlp_kernel(x_ref, w1_ref, b1_ref, w2_ref, b2_ref, w3_ref, b3_ref,
                         out_ref, *, out_dim):
    """Fused 3-layer MLP + softplus(std) for one row tile, entirely in VMEM."""

    def leaky_relu(v, slope=0.2):
        return jnp.where(v >= 0, v, slope * v)

    # MXU operands in bf16, accumulation + epilogue in f32.
    x = x_ref[...].astype(jnp.bfloat16)

    h = jnp.dot(x, w1_ref[...], preferred_element_type=jnp.float32) + b1_ref[...]
    h = leaky_relu(h)

    h = jnp.dot(h.astype(jnp.bfloat16), w2_ref[...],
                preferred_element_type=jnp.float32) + b2_ref[...]
    h = leaky_relu(h)

    y = jnp.dot(h.astype(jnp.bfloat16), w3_ref[...],
                preferred_element_type=jnp.float32) + b3_ref[...]

    # F.softplus (beta=1, threshold=20) + 1e-5, computed on the whole slab
    # (EUP work on the mean lanes is free), then select std lanes with an
    # iota mask -> no unaligned lane slicing, single lane-contiguous store.
    sp = jnp.where(y > 20.0, y,
                   jnp.log1p(jnp.exp(jnp.minimum(y, 20.0)))) + 1e-5
    col = lax.broadcasted_iota(jnp.int32, y.shape, 1)
    out_ref[...] = jnp.where(col < out_dim, y, sp).astype(out_ref.dtype)


@functools.partial(jax.jit, static_argnames=("output_dim",))
def gaussian_forward(x, params, output_dim):
    """Pallas-backed forward of the Gaussian module.

    x: (N, D_in) or (B, S, D_in) float32
    params: dict with w1,b1,w2,b2,w3,b3 (f32; weights cast to bf16 for the MXU)
    returns (mean, std), each (..., output_dim), float32
    """
    orig_shape = x.shape
    d_in = orig_shape[-1]
    x2d = x.reshape(-1, d_in)
    n = x2d.shape[0]

    # Weights as bf16 MXU operands (halves weight DMA bytes); biases stay f32
    # as (1, H) lane-axis rows.
    w1 = params["w1"].astype(jnp.bfloat16)
    w2 = params["w2"].astype(jnp.bfloat16)
    w3 = params["w3"].astype(jnp.bfloat16)
    b1r = params["b1"].reshape(1, -1).astype(jnp.float32)
    b2r = params["b2"].reshape(1, -1).astype(jnp.float32)
    b3r = params["b3"].reshape(1, -1).astype(jnp.float32)

    h1 = w1.shape[1]
    h2 = w2.shape[1]
    d2 = w3.shape[1]
    assert d2 == 2 * output_dim

    # Row tiling: full-array block for small N (satisfies the (8,128) exception),
    # capped multiple-of-8 tile + zero padding otherwise so the grid pipelines.
    if n <= _TM_MAX:
        tm = n
        n_pad = n
        x_in = x2d
    else:
        tm = _TM_MAX
        n_pad = pl.cdiv(n, tm) * tm
        x_in = jnp.pad(x2d, ((0, n_pad - n), (0, 0))) if n_pad != n else x2d

    grid = (n_pad // tm,)
    kernel = functools.partial(_gaussian_mlp_kernel, out_dim=output_dim)

    y = pl.pallas_call(
        kernel,
        out_shape=jax.ShapeDtypeStruct((n_pad, d2), jnp.float32),
        grid=grid,
        in_specs=[
            pl.BlockSpec((tm, d_in), lambda i: (i, 0)),   # x tile (pipelined)
            pl.BlockSpec((d_in, h1), lambda i: (0, 0)),   # W1 (resident)
            pl.BlockSpec((1, h1), lambda i: (0, 0)),      # b1
            pl.BlockSpec((h1, h2), lambda i: (0, 0)),     # W2
            pl.BlockSpec((1, h2), lambda i: (0, 0)),      # b2
            pl.BlockSpec((h2, d2), lambda i: (0, 0)),     # W3
            pl.BlockSpec((1, d2), lambda i: (0, 0)),      # b3
        ],
        out_specs=pl.BlockSpec((tm, d2), lambda i: (i, 0)),  # mean||std slab
        compiler_params=pltpu.CompilerParams(
            dimension_semantics=("parallel",)),
    )(x_in, w1, b1r, w2, b2r, w3, b3r)

    y = y[:n]
    mean = y[:, :output_dim]
    std = y[:, output_dim:]
    out_shape = orig_shape[:-1] + (output_dim,)
    return mean.reshape(out_shape), std.reshape(out_shape)


def _reference_forward(x, params, output_dim, *, mxu_bf16=False):
    """Pure-jnp reference matching the PyTorch module semantics.

    mxu_bf16=True emulates the kernel's bf16 MXU operands for a tight check.
    """
    cast = (lambda v: v.astype(jnp.bfloat16)) if mxu_bf16 else (lambda v: v)
    x2d = x.reshape(-1, x.shape[-1])

    def lrelu(v):
        return jnp.where(v >= 0, v, 0.2 * v)

    h = lrelu(jnp.dot(cast(x2d), cast(params["w1"]),
                      preferred_element_type=jnp.float32) + params["b1"])
    h = lrelu(jnp.dot(cast(h), cast(params["w2"]),
                      preferred_element_type=jnp.float32) + params["b2"])
    y = jnp.dot(cast(h), cast(params["w3"]),
                preferred_element_type=jnp.float32) + params["b3"]
    mean, std_raw = jnp.split(y, 2, axis=-1)
    std = jax.nn.softplus(std_raw) + 1e-5
    out_shape = x.shape[:-1] + (output_dim,)
    return mean.reshape(out_shape), std.reshape(out_shape)


def _init_params(key, input_dim, output_dim, hidden_units):
    """Deterministic synthetic init (stand-in for utils.initialize_weight)."""
    h1, h2 = hidden_units
    ks = jax.random.split(key, 3)
    scale = lambda fan_in: 1.0 / jnp.sqrt(jnp.float32(fan_in))
    return {
        "w1": jax.random.normal(ks[0], (input_dim, h1), jnp.float32) * scale(input_dim),
        "b1": jnp.zeros((h1,), jnp.float32),
        "w2": jax.random.normal(ks[1], (h1, h2), jnp.float32) * scale(h1),
        "b2": jnp.zeros((h2,), jnp.float32),
        "w3": jax.random.normal(ks[2], (h2, 2 * output_dim), jnp.float32) * scale(h2),
        "b3": jnp.zeros((2 * output_dim,), jnp.float32),
    }


def _check(x, params, output_dim):
    mean, std = gaussian_forward(x, params, output_dim)
    jax.block_until_ready((mean, std))

    exp_shape = x.shape[:-1] + (output_dim,)
    assert mean.shape == exp_shape and std.shape == exp_shape
    assert bool(jnp.all(std > 0))
    assert bool(jnp.all(jnp.isfinite(mean))) and bool(jnp.all(jnp.isfinite(std)))

    # Tight check vs a reference that uses the same bf16 MXU operands.
    rm_b, rs_b = _reference_forward(x, params, output_dim, mxu_bf16=True)
    assert jnp.allclose(mean, rm_b, atol=2e-3, rtol=2e-3)
    assert jnp.allclose(std, rs_b, atol=2e-3, rtol=2e-3)

    # Loose check vs the exact f32 PyTorch-equivalent reference.
    rm_f, rs_f = _reference_forward(x, params, output_dim, mxu_bf16=False)
    assert jnp.allclose(mean, rm_f, atol=8e-2, rtol=8e-2)
    assert jnp.allclose(std, rs_f, atol=8e-2, rtol=8e-2)


if __name__ == "__main__":
    key = jax.random.PRNGKey(0)
    k_param, k_x1, k_x2 = jax.random.split(key, 3)

    # Small shapes consistent with the module: (B, S, input_dim) sequence input,
    # hidden_units matching the module default-ish width (lane-aligned).
    B, S = 2, 8
    INPUT_DIM, OUTPUT_DIM = 32, 16
    HIDDEN = (256, 256)

    params = _init_params(k_param, INPUT_DIM, OUTPUT_DIM, HIDDEN)

    # 3-D (B, S, D_in) path — single full-array row tile.
    x3d = jax.random.normal(k_x1, (B, S, INPUT_DIM), jnp.float32)
    _check(x3d, params, OUTPUT_DIM)

    # 2-D (N, D_in) path with N > tile cap and N % tm != 0 — exercises the
    # multi-step pipelined grid + row padding.
    x2d = jax.random.normal(k_x2, (1100, INPUT_DIM), jnp.float32)
    _check(x2d, params, OUTPUT_DIM)

    print("KERNEL_OK")
</pallas_src>

<mosaic_0001>
module attributes {stable_mosaic.version = 11 : i64} {
  func.func @_gaussian_mlp_kernel(%arg0: i32, %arg1: memref<16x32xf32, #tpu.memory_space<vmem>>, %arg2: memref<32x256xbf16, #tpu.memory_space<vmem>>, %arg3: memref<1x256xf32, #tpu.memory_space<vmem>>, %arg4: memref<256x256xbf16, #tpu.memory_space<vmem>>, %arg5: memref<1x256xf32, #tpu.memory_space<vmem>>, %arg6: memref<256x32xbf16, #tpu.memory_space<vmem>>, %arg7: memref<1x32xf32, #tpu.memory_space<vmem>>, %arg8: memref<16x32xf32, #tpu.memory_space<vmem>>) attributes {dimension_semantics = [#tpu.dimension_semantics<parallel>], iteration_bounds = array<i64: 1>, scalar_prefetch = 0 : i64, scratch_operands = 0 : i64, tpu.core_type = #tpu.core_type<tc>, window_params = [{transform_indices = @transform_0, window_bounds = array<i64: 16, 32>}, {pipeline_mode = #tpu.pipeline_mode<synchronous>, transform_indices = @transform_1, window_bounds = array<i64: 32, 256>}, {pipeline_mode = #tpu.pipeline_mode<synchronous>, transform_indices = @transform_2, window_bounds = array<i64: 1, 256>}, {pipeline_mode = #tpu.pipeline_mode<synchronous>, transform_indices = @transform_3, window_bounds = array<i64: 256, 256>}, {pipeline_mode = #tpu.pipeline_mode<synchronous>, transform_indices = @transform_4, window_bounds = array<i64: 1, 256>}, {pipeline_mode = #tpu.pipeline_mode<synchronous>, transform_indices = @transform_5, window_bounds = array<i64: 256, 32>}, {pipeline_mode = #tpu.pipeline_mode<synchronous>, transform_indices = @transform_6, window_bounds = array<i64: 1, 32>}, {transform_indices = @transform_7, window_bounds = array<i64: 16, 32>}]} {
    %c0 = arith.constant 0 : index
    %c0_0 = arith.constant 0 : index
    %0 = vector.load %arg1[%c0, %c0_0] : memref<16x32xf32, #tpu.memory_space<vmem>>, vector<16x32xf32>
    %1 = arith.truncf %0 : vector<16x32xf32> to vector<16x32xbf16>
    %c0_1 = arith.constant 0 : index
    %c0_2 = arith.constant 0 : index
    %2 = vector.load %arg2[%c0_1, %c0_2] : memref<32x256xbf16, #tpu.memory_space<vmem>>, vector<32x256xbf16>
    %cst = arith.constant dense<0.000000e+00> : vector<16x256xf32>
    %3 = tpu.matmul %1, %2, %cst {dimension_numbers = #tpu.dot_dimension_numbers<[1], [0], [0], [1], [0, 0, 1, 1], [], []>} : vector<16x32xbf16>, vector<32x256xbf16>, vector<16x256xf32> -> vector<16x256xf32>
    %c0_3 = arith.constant 0 : index
    %c0_4 = arith.constant 0 : index
    %4 = vector.load %arg3[%c0_3, %c0_4] : memref<1x256xf32, #tpu.memory_space<vmem>>, vector<1x256xf32>
    %5 = vector.broadcast %4 : vector<1x256xf32> to vector<16x256xf32>
    %6 = arith.addf %3, %5 : vector<16x256xf32>
    %cst_5 = arith.constant 0.000000e+00 : f32
    %7 = vector.broadcast %cst_5 : f32 to vector<16x256xf32>
    %8 = arith.cmpf oge, %6, %7 : vector<16x256xf32>
    %cst_6 = arith.constant 2.000000e-01 : f32
    %9 = vector.broadcast %cst_6 : f32 to vector<16x256xf32>
    %10 = arith.mulf %9, %6 : vector<16x256xf32>
    %11 = arith.select %8, %6, %10 : vector<16x256xi1>, vector<16x256xf32>
    %12 = arith.truncf %11 : vector<16x256xf32> to vector<16x256xbf16>
    %c0_7 = arith.constant 0 : index
    %c0_8 = arith.constant 0 : index
    %13 = vector.load %arg4[%c0_7, %c0_8] : memref<256x256xbf16, #tpu.memory_space<vmem>>, vector<256x256xbf16>
    %cst_9 = arith.constant dense<0.000000e+00> : vector<16x256xf32>
    %14 = tpu.matmul %12, %13, %cst_9 {dimension_numbers = #tpu.dot_dimension_numbers<[1], [0], [0], [1], [0, 0, 1, 1], [], []>} : vector<16x256xbf16>, vector<256x256xbf16>, vector<16x256xf32> -> vector<16x256xf32>
    %c0_10 = arith.constant 0 : index
    %c0_11 = arith.constant 0 : index
    %15 = vector.load %arg5[%c0_10, %c0_11] : memref<1x256xf32, #tpu.memory_space<vmem>>, vector<1x256xf32>
    %16 = vector.broadcast %15 : vector<1x256xf32> to vector<16x256xf32>
    %17 = arith.addf %14, %16 : vector<16x256xf32>
    %cst_12 = arith.constant 0.000000e+00 : f32
    %18 = vector.broadcast %cst_12 : f32 to vector<16x256xf32>
    %19 = arith.cmpf oge, %17, %18 : vector<16x256xf32>
    %cst_13 = arith.constant 2.000000e-01 : f32
    %20 = vector.broadcast %cst_13 : f32 to vector<16x256xf32>
    %21 = arith.mulf %20, %17 : vector<16x256xf32>
    %22 = arith.select %19, %17, %21 : vector<16x256xi1>, vector<16x256xf32>
    %23 = arith.truncf %22 : vector<16x256xf32> to vector<16x256xbf16>
    %c0_14 = arith.constant 0 : index
    %c0_15 = arith.constant 0 : index
    %24 = vector.load %arg6[%c0_14, %c0_15] : memref<256x32xbf16, #tpu.memory_space<vmem>>, vector<256x32xbf16>
    %cst_16 = arith.constant dense<0.000000e+00> : vector<16x32xf32>
    %25 = tpu.matmul %23, %24, %cst_16 {dimension_numbers = #tpu.dot_dimension_numbers<[1], [0], [0], [1], [0, 0, 1, 1], [], []>} : vector<16x256xbf16>, vector<256x32xbf16>, vector<16x32xf32> -> vector<16x32xf32>
    %c0_17 = arith.constant 0 : index
    %c0_18 = arith.constant 0 : index
    %26 = vector.load %arg7[%c0_17, %c0_18] : memref<1x32xf32, #tpu.memory_space<vmem>>, vector<1x32xf32>
    %27 = vector.broadcast %26 : vector<1x32xf32> to vector<16x32xf32>
    %28 = arith.addf %25, %27 : vector<16x32xf32>
    %cst_19 = arith.constant 2.000000e+01 : f32
    %29 = vector.broadcast %cst_19 : f32 to vector<16x32xf32>
    %30 = arith.cmpf ogt, %28, %29 : vector<16x32xf32>
    %cst_20 = arith.constant 2.000000e+01 : f32
    %31 = vector.broadcast %cst_20 : f32 to vector<16x32xf32>
    %32 = arith.minimumf %28, %31 : vector<16x32xf32>
    %33 = math.exp %32 : vector<16x32xf32>
    %34 = math.log1p %33 : vector<16x32xf32>
    %35 = arith.select %30, %28, %34 : vector<16x32xi1>, vector<16x32xf32>
    %cst_21 = arith.constant 9.99999974E-6 : f32
    %36 = vector.broadcast %cst_21 : f32 to vector<16x32xf32>
    %37 = arith.addf %35, %36 : vector<16x32xf32>
    %38 = tpu.iota {dimensions = array<i32: 1>} : vector<16x32xi32>
    %c16_i32 = arith.constant 16 : i32
    %39 = vector.broadcast %c16_i32 : i32 to vector<16x32xi32>
    %40 = arith.cmpi slt, %38, %39 : vector<16x32xi32>
    %41 = arith.select %40, %28, %37 : vector<16x32xi1>, vector<16x32xf32>
    %c0_22 = arith.constant 0 : index
    %c0_23 = arith.constant 0 : index
    %42 = vector.load %arg8[%c0_22, %c0_23] : memref<16x32xf32, #tpu.memory_space<vmem>>, vector<16x32xf32>
    tpu.vector_store %arg8[%c0_22, %c0_23], %41 {strides = array<i32>} : memref<16x32xf32, #tpu.memory_space<vmem>>, vector<16x32xf32>,
    return
  }
  func.func @transform_0(%arg0: i32) -> (i32, i32) {
    %c0_i32 = arith.constant 0 : i32
    %c0_i32_0 = arith.constant 0 : i32
    return %arg0, %c0_i32 : i32, i32
  }
  func.func @transform_1(%arg0: i32) -> (i32, i32) {
    %c0_i32 = arith.constant 0 : i32
    %c0_i32_0 = arith.constant 0 : i32
    %c0_i32_1 = arith.constant 0 : i32
    return %c0_i32, %c0_i32_0 : i32, i32
  }
  func.func @transform_2(%arg0: i32) -> (i32, i32) {
    %c0_i32 = arith.constant 0 : i32
    %c0_i32_0 = arith.constant 0 : i32
    %c0_i32_1 = arith.constant 0 : i32
    return %c0_i32, %c0_i32_0 : i32, i32
  }
  func.func @transform_3(%arg0: i32) -> (i32, i32) {
    %c0_i32 = arith.constant 0 : i32
    %c0_i32_0 = arith.constant 0 : i32
    %c0_i32_1 = arith.constant 0 : i32
    return %c0_i32, %c0_i32_0 : i32, i32
  }
  func.func @transform_4(%arg0: i32) -> (i32, i32) {
    %c0_i32 = arith.constant 0 : i32
    %c0_i32_0 = arith.constant 0 : i32
    %c0_i32_1 = arith.constant 0 : i32
    return %c0_i32, %c0_i32_0 : i32, i32
  }
  func.func @transform_5(%arg0: i32) -> (i32, i32) {
    %c0_i32 = arith.constant 0 : i32
    %c0_i32_0 = arith.constant 0 : i32
    %c0_i32_1 = arith.constant 0 : i32
    return %c0_i32, %c0_i32_0 : i32, i32
  }
  func.func @transform_6(%arg0: i32) -> (i32, i32) {
    %c0_i32 = arith.constant 0 : i32
    %c0_i32_0 = arith.constant 0 : i32
    %c0_i32_1 = arith.constant 0 : i32
    return %c0_i32, %c0_i32_0 : i32, i32
  }
  func.func @transform_7(%arg0: i32) -> (i32, i32) {
    %c0_i32 = arith.constant 0 : i32
    %c0_i32_0 = arith.constant 0 : i32
    return %arg0, %c0_i32 : i32, i32
  }
}

</mosaic_0001>

<llo_original>
// kernel: gaussian_forward.1
$region0: #{gaussian_forward.1}
  #allocation0 [shape = 'u32[]', space=smem, size = 0x4, offset = 0x4, fixed_abs, tag = 'smem constant byte address 0x4 - core index']
  #allocation1 [shape = 'u32[72,128]{1,0:T(1,128)}', space=vmem, size = 0x9000, scoped, tag = 'internal scratch']
  %s0 = inlined_call_operand.vmem [shape: f32[16,32], index: 0, kind: input, shape index: {}]
  %s1 = inlined_call_operand.vmem [shape: bf16[32,256], index: 1, kind: input, shape index: {}]
  %s2 = inlined_call_operand.vmem [shape: f32[1,256], index: 2, kind: input, shape index: {}]
  %s3 = inlined_call_operand.vmem [shape: bf16[256,256], index: 3, kind: input, shape index: {}]
  %s4 = inlined_call_operand.vmem [shape: f32[1,256], index: 4, kind: input, shape index: {}]
  %s5 = inlined_call_operand.vmem [shape: bf16[256,32], index: 5, kind: input, shape index: {}]
  %s6 = inlined_call_operand.vmem [shape: f32[1,32], index: 6, kind: input, shape index: {}]
  %s7 = inlined_call_operand.vmem [shape: f32[16,32], index: 7, kind: output, shape index: {}]
  %s8 = sld [smem:[#allocation0]]
  $region38: #{gaussian_forward.1} parent=0
    _
  %s10 = ssub.s32 1, %s8
  %s11 = scalar_select 0, %s10, %s8
  // Predicated region
  $region2: #{gaussian_forward.1} parent=0 // pred_check
    _
  $region3: #{gaussian_forward.1} parent=0 // pred_check_branch
    %13 = sbr.rel (0) target = $region5
  $region4: #{gaussian_forward.1} parent=0 // pred_region
    _
  $region5: #{gaussian_forward.1} parent=0 // pred_fallthru
    _
  // Predicated region
  $region6: #{gaussian_forward.1} parent=0 // pred_check
    _
  $region7: #{gaussian_forward.1} parent=0 // pred_check_branch
    %15 = sbr.rel (0) target = $region9
  $region8: #{gaussian_forward.1} parent=0 // pred_region
    _
  $region9: #{gaussian_forward.1} parent=0 // pred_fallthru
    _
  // Predicated region
  $region10: #{gaussian_forward.1} parent=0 // pred_check
    _
  $region11: #{gaussian_forward.1} parent=0 // pred_check_branch
    %17 = sbr.rel (0) target = $region13
  $region12: #{gaussian_forward.1} parent=0 // pred_region
    _
  $region13: #{gaussian_forward.1} parent=0 // pred_fallthru
    _
  // Predicated region
  $region14: #{gaussian_forward.1} parent=0 // pred_check
    _
  $region15: #{gaussian_forward.1} parent=0 // pred_check_branch
    %19 = sbr.rel (0) target = $region17
  $region16: #{gaussian_forward.1} parent=0 // pred_region
    _
  $region17: #{gaussian_forward.1} parent=0 // pred_fallthru
    _
  // Predicated region
  $region18: #{gaussian_forward.1} parent=0 // pred_check
    _
  $region19: #{gaussian_forward.1} parent=0 // pred_check_branch
    %21 = sbr.rel (0) target = $region21
  $region20: #{gaussian_forward.1} parent=0 // pred_region
    _
  $region21: #{gaussian_forward.1} parent=0 // pred_fallthru
    _
  // Predicated region
  $region22: #{gaussian_forward.1} parent=0 // pred_check
    _
  $region23: #{gaussian_forward.1} parent=0 // pred_check_branch
    %23 = sbr.rel (0) target = $region25
  $region24: #{gaussian_forward.1} parent=0 // pred_region
    _
  $region25: #{gaussian_forward.1} parent=0 // pred_fallthru
    _
  // Predicated region
  $region26: #{gaussian_forward.1} parent=0 // pred_check
    _
  $region27: #{gaussian_forward.1} parent=0 // pred_check_branch
    %25 = sbr.rel (0) target = $region29
  $region28: #{gaussian_forward.1} parent=0 // pred_region
    _
  $region29: #{gaussian_forward.1} parent=0 // pred_fallthru
    _
  %v27 = vld [vmem:[%s0] sm:$0xff]
  %v28 = vld [vmem:[%s0 + $0x8] sm:$0xff]
  %v29 = vpack.c.bf16 %v28, %v27
  %v30 = vld [vmem:[%s1] sm:$0xff]
  %v31 = vld [vmem:[%s1 + $0x8] sm:$0xff]
  %v32 = vld [vmem:[%s1 + $0x10] sm:$0xff]
  %v33 = vld [vmem:[%s1 + $0x18] sm:$0xff]
  %v34 = vld [vmem:[%s2] sm:$0x3]
  %v36 = vperm.slane %v34, 0
  %v37 = vperm.slane %v34, 1
  %v44 = vunpack.c.l.b16 %v30
  %v45 = vunpack.c.h.b16 %v30
  %v46 = vunpack.c.l.b16 %v31
  %v47 = vunpack.c.h.b16 %v31
  %v48 = vunpack.c.l.b16 %v32
  %v49 = vunpack.c.h.b16 %v32
  %v50 = vunpack.c.l.b16 %v33
  %v51 = vunpack.c.h.b16 %v33
  %v52 = vpack.c.b16 %v46, %v44
  %v53 = vpack.c.b16 %v47, %v45
  %v54 = vpack.c.b16 %v50, %v48
  %v55 = vpack.c.b16 %v51, %v49
  %vm60 = vcmask 261120
  %v62 = vsel %vm60, %v29, 0
  %64 = vmatpush.bf16.msra.mxu0 0
  %65 = vmatpush.bf16.msra.mxu0 0
  %66 = vmatpush.bf16.msra.mxu0 0
  %67 = vmatpush.bf16.msra.mxu0 0
  %68 = vmatpush.bf16.msra.mxu0 0
  %69 = vmatpush.bf16.msra.mxu0 0
  %70 = vmatpush.bf16.msra.mxu0 %v54
  %71 = vmatpush.bf16.msra.mxu0 %v52
  %72 = vmatmul.bf16.gmra.mxu0 %v62
  %v73 = vpop.f32.mrf.mxu0
  %v74 = vadd.f32 %v36, %v73
  %v75 = vpop.f32.mrf.mxu0
  %v76 = vadd.f32 %v36, %v75
  %77 = vdwg.mxu0
  %78 = vmatpush.bf16.msra.mxu0 0
  %79 = vmatpush.bf16.msra.mxu0 0
  %80 = vmatpush.bf16.msra.mxu0 0
  %81 = vmatpush.bf16.msra.mxu0 0
  %82 = vmatpush.bf16.msra.mxu0 0
  %83 = vmatpush.bf16.msra.mxu0 0
  %84 = vmatpush.bf16.msra.mxu0 %v55
  %85 = vmatpush.bf16.msra.mxu0 %v53
  %86 = vmatmul.bf16.gmra.mxu0 %v62
  %v87 = vpop.f32.mrf.mxu0
  %v88 = vadd.f32 %v37, %v87
  %v89 = vpop.f32.mrf.mxu0
  %v90 = vadd.f32 %v37, %v89
  %91 = vdwg.mxu0
  %vm92 = vcmp.ge.f32.partialorder %v74, 0.0
  %vm93 = vcmp.ge.f32.partialorder %v88, 0.0
  %vm94 = vcmp.ge.f32.partialorder %v76, 0.0
  %vm95 = vcmp.ge.f32.partialorder %v90, 0.0
  %v96 = vmul.f32 %v74, 0.2
  %v97 = vmul.f32 %v88, 0.2
  %v98 = vmul.f32 %v76, 0.2
  %v99 = vmul.f32 %v90, 0.2
  %v100 = vsel %vm92, %v74, %v96
  %v101 = vsel %vm93, %v88, %v97
  %v102 = vsel %vm94, %v76, %v98
  %v103 = vsel %vm95, %v90, %v99
  %v104 = vpack.c.bf16 %v102, %v100
  %v105 = vpack.c.bf16 %v103, %v101
  %v106 = vld [vmem:[%s3] sm:$0xff]
  %v107 = vld [vmem:[%s3 + $0x8] sm:$0xff]
  %v108 = vld [vmem:[%s3 + $0x10] sm:$0xff]
  %v109 = vld [vmem:[%s3 + $0x18] sm:$0xff]
  %v110 = vld [vmem:[%s3 + $0x20] sm:$0xff]
  %v111 = vld [vmem:[%s3 + $0x28] sm:$0xff]
  %v112 = vld [vmem:[%s3 + $0x30] sm:$0xff]
  %v113 = vld [vmem:[%s3 + $0x38] sm:$0xff]
  %v114 = vld [vmem:[%s3 + $0x40] sm:$0xff]
  %v115 = vld [vmem:[%s3 + $0x48] sm:$0xff]
  %v116 = vld [vmem:[%s3 + $0x50] sm:$0xff]
  %v117 = vld [vmem:[%s3 + $0x58] sm:$0xff]
  %v118 = vld [vmem:[%s3 + $0x60] sm:$0xff]
  %v119 = vld [vmem:[%s3 + $0x68] sm:$0xff]
  %v120 = vld [vmem:[%s3 + $0x70] sm:$0xff]
  %v121 = vld [vmem:[%s3 + $0x78] sm:$0xff]
  %v122 = vld [vmem:[%s3 + $0x80] sm:$0xff]
  %v123 = vld [vmem:[%s3 + $0x88] sm:$0xff]
  %v124 = vld [vmem:[%s3 + $0x90] sm:$0xff]
  %v125 = vld [vmem:[%s3 + $0x98] sm:$0xff]
  %v126 = vld [vmem:[%s3 + $0xa0] sm:$0xff]
  %v127 = vld [vmem:[%s3 + $0xa8] sm:$0xff]
  %v128 = vld [vmem:[%s3 + $0xb0] sm:$0xff]
  %v129 = vld [vmem:[%s3 + $0xb8] sm:$0xff]
  %v130 = vld [vmem:[%s3 + $0xc0] sm:$0xff]
  %v131 = vld [vmem:[%s3 + $0xc8] sm:$0xff]
  %v132 = vld [vmem:[%s3 + $0xd0] sm:$0xff]
  %v133 = vld [vmem:[%s3 + $0xd8] sm:$0xff]
  %v134 = vld [vmem:[%s3 + $0xe0] sm:$0xff]
  %v135 = vld [vmem:[%s3 + $0xe8] sm:$0xff]
  %v136 = vld [vmem:[%s3 + $0xf0] sm:$0xff]
  %v137 = vld [vmem:[%s3 + $0xf8] sm:$0xff]
  %v138 = vld [vmem:[%s4] sm:$0x3]
  %v140 = vperm.slane %v138, 0
  %v141 = vperm.slane %v138, 1
  %v176 = vunpack.c.l.b16 %v106
  %v177 = vunpack.c.h.b16 %v106
  %v178 = vunpack.c.l.b16 %v107
  %v179 = vunpack.c.h.b16 %v107
  %v180 = vunpack.c.l.b16 %v108
  %v181 = vunpack.c.h.b16 %v108
  %v182 = vunpack.c.l.b16 %v109
  %v183 = vunpack.c.h.b16 %v109
  %v184 = vunpack.c.l.b16 %v110
  %v185 = vunpack.c.h.b16 %v110
  %v186 = vunpack.c.l.b16 %v111
  %v187 = vunpack.c.h.b16 %v111
  %v188 = vunpack.c.l.b16 %v112
  %v189 = vunpack.c.h.b16 %v112
  %v190 = vunpack.c.l.b16 %v113
  %v191 = vunpack.c.h.b16 %v113
  %v192 = vunpack.c.l.b16 %v114
  %v193 = vunpack.c.h.b16 %v114
  %v194 = vunpack.c.l.b16 %v115
  %v195 = vunpack.c.h.b16 %v115
  %v196 = vunpack.c.l.b16 %v116
  %v197 = vunpack.c.h.b16 %v116
  %v198 = vunpack.c.l.b16 %v117
  %v199 = vunpack.c.h.b16 %v117
  %v200 = vunpack.c.l.b16 %v118
  %v201 = vunpack.c.h.b16 %v118
  %v202 = vunpack.c.l.b16 %v119
  %v203 = vunpack.c.h.b16 %v119
  %v204 = vunpack.c.l.b16 %v120
  %v205 = vunpack.c.h.b16 %v120
  %v206 = vunpack.c.l.b16 %v121
  %v207 = vunpack.c.h.b16 %v121
  %v208 = vunpack.c.l.b16 %v122
  %v209 = vunpack.c.h.b16 %v122
  %v210 = vunpack.c.l.b16 %v123
  %v211 = vunpack.c.h.b16 %v123
  %v212 = vunpack.c.l.b16 %v124
  %v213 = vunpack.c.h.b16 %v124
  %v214 = vunpack.c.l.b16 %v125
  %v215 = vunpack.c.h.b16 %v125
  %v216 = vunpack.c.l.b16 %v126
  %v217 = vunpack.c.h.b16 %v126
  %v218 = vunpack.c.l.b16 %v127
  %v219 = vunpack.c.h.b16 %v127
  %v220 = vunpack.c.l.b16 %v128
  %v221 = vunpack.c.h.b16 %v128
  %v222 = vunpack.c.l.b16 %v129
  %v223 = vunpack.c.h.b16 %v129
  %v224 = vunpack.c.l.b16 %v130
  %v225 = vunpack.c.h.b16 %v130
  %v226 = vunpack.c.l.b16 %v131
  %v227 = vunpack.c.h.b16 %v131
  %v228 = vunpack.c.l.b16 %v132
  %v229 = vunpack.c.h.b16 %v132
  %v230 = vunpack.c.l.b16 %v133
  %v231 = vunpack.c.h.b16 %v133
  %v232 = vunpack.c.l.b16 %v134
  %v233 = vunpack.c.h.b16 %v134
  %v234 = vunpack.c.l.b16 %v135
  %v235 = vunpack.c.h.b16 %v135
  %v236 = vunpack.c.l.b16 %v136
  %v237 = vunpack.c.h.b16 %v136
  %v238 = vunpack.c.l.b16 %v137
  %v239 = vunpack.c.h.b16 %v137
  %v240 = vpack.c.b16 %v178, %v176
  %v241 = vpack.c.b16 %v179, %v177
  %v242 = vpack.c.b16 %v182, %v180
  %v243 = vpack.c.b16 %v183, %v181
  %v244 = vpack.c.b16 %v186, %v184
  %v245 = vpack.c.b16 %v187, %v185
  %v246 = vpack.c.b16 %v190, %v188
  %v247 = vpack.c.b16 %v191, %v189
  %v248 = vpack.c.b16 %v194, %v192
  %v249 = vpack.c.b16 %v195, %v193
  %v250 = vpack.c.b16 %v198, %v196
  %v251 = vpack.c.b16 %v199, %v197
  %v252 = vpack.c.b16 %v202, %v200
  %v253 = vpack.c.b16 %v203, %v201
  %v254 = vpack.c.b16 %v206, %v204
  %v255 = vpack.c.b16 %v207, %v205
  %v256 = vpack.c.b16 %v210, %v208
  %v257 = vpack.c.b16 %v211, %v209
  %v258 = vpack.c.b16 %v214, %v212
  %v259 = vpack.c.b16 %v215, %v213
  %v260 = vpack.c.b16 %v218, %v216
  %v261 = vpack.c.b16 %v219, %v217
  %v262 = vpack.c.b16 %v222, %v220
  %v263 = vpack.c.b16 %v223, %v221
  %v264 = vpack.c.b16 %v226, %v224
  %v265 = vpack.c.b16 %v227, %v225
  %v266 = vpack.c.b16 %v230, %v228
  %v267 = vpack.c.b16 %v231, %v229
  %v268 = vpack.c.b16 %v234, %v232
  %v269 = vpack.c.b16 %v235, %v233
  %v270 = vpack.c.b16 %v238, %v236
  %v271 = vpack.c.b16 %v239, %v237
  %304 = vmatpush.bf16.msra.mxu0 %v254
  %305 = vmatpush.bf16.msra.mxu0 %v252
  %306 = vmatpush.bf16.msra.mxu0 %v250
  %307 = vmatpush.bf16.msra.mxu0 %v248
  %308 = vmatpush.bf16.msra.mxu0 %v246
  %309 = vmatpush.bf16.msra.mxu0 %v244
  %310 = vmatpush.bf16.msra.mxu0 %v242
  %311 = vmatpush.bf16.msra.mxu0 %v240
  %312 = vmatmul.bf16.gmra.mxu0 %v104
  %v313 = vpop.f32.mrf.mxu0
  %v314 = vadd.f32 %v140, %v313
  %v315 = vpop.f32.mrf.mxu0
  %v316 = vadd.f32 %v140, %v315
  %317 = vdwg.mxu0
  %318 = vmatpush.bf16.msra.mxu0 %v270
  %319 = vmatpush.bf16.msra.mxu0 %v268
  %320 = vmatpush.bf16.msra.mxu0 %v266
  %321 = vmatpush.bf16.msra.mxu0 %v264
  %322 = vmatpush.bf16.msra.mxu0 %v262
  %323 = vmatpush.bf16.msra.mxu0 %v260
  %324 = vmatpush.bf16.msra.mxu0 %v258
  %325 = vmatpush.bf16.msra.mxu0 %v256
  %326 = vmatmul.bf16.gmra.mxu0 %v105
  %v327 = vpop.f32.mrf.mxu0
  %v328 = vadd.f32 %v314, %v327
  %v329 = vpop.f32.mrf.mxu0
  %v330 = vadd.f32 %v316, %v329
  %331 = vdwg.mxu0
  %332 = vmatpush.bf16.msra.mxu0 %v255
  %333 = vmatpush.bf16.msra.mxu0 %v253
  %334 = vmatpush.bf16.msra.mxu0 %v251
  %335 = vmatpush.bf16.msra.mxu0 %v249
  %336 = vmatpush.bf16.msra.mxu0 %v247
  %337 = vmatpush.bf16.msra.mxu0 %v245
  %338 = vmatpush.bf16.msra.mxu0 %v243
  %339 = vmatpush.bf16.msra.mxu0 %v241
  %340 = vmatmul.bf16.gmra.mxu0 %v104
  %v341 = vpop.f32.mrf.mxu0
  %v342 = vadd.f32 %v141, %v341
  %v343 = vpop.f32.mrf.mxu0
  %v344 = vadd.f32 %v141, %v343
  %345 = vdwg.mxu0
  %346 = vmatpush.bf16.msra.mxu0 %v271
  %347 = vmatpush.bf16.msra.mxu0 %v269
  %348 = vmatpush.bf16.msra.mxu0 %v267
  %349 = vmatpush.bf16.msra.mxu0 %v265
  %350 = vmatpush.bf16.msra.mxu0 %v263
  %351 = vmatpush.bf16.msra.mxu0 %v261
  %352 = vmatpush.bf16.msra.mxu0 %v259
  %353 = vmatpush.bf16.msra.mxu0 %v257
  %354 = vmatmul.bf16.gmra.mxu0 %v105
  %v355 = vpop.f32.mrf.mxu0
  %v356 = vadd.f32 %v342, %v355
  %v357 = vpop.f32.mrf.mxu0
  %v358 = vadd.f32 %v344, %v357
  %359 = vdwg.mxu0
  %vm360 = vcmp.ge.f32.partialorder %v328, 0.0
  %vm361 = vcmp.ge.f32.partialorder %v356, 0.0
  %vm362 = vcmp.ge.f32.partialorder %v330, 0.0
  %vm363 = vcmp.ge.f32.partialorder %v358, 0.0
  %v364 = vmul.f32 %v328, 0.2
  %v365 = vmul.f32 %v356, 0.2
  %v366 = vmul.f32 %v330, 0.2
  %v367 = vmul.f32 %v358, 0.2
  %v368 = vsel %vm360, %v328, %v364
  %v369 = vsel %vm361, %v356, %v365
  %v370 = vsel %vm362, %v330, %v366
  %v371 = vsel %vm363, %v358, %v367
  %v372 = vpack.c.bf16 %v370, %v368
  %v373 = vpack.c.bf16 %v371, %v369
  %v374 = vld [vmem:[%s5] sm:$0xf]
  %v375 = vld [vmem:[%s5 + $0x4] sm:$0xf]
  %v376 = vld [vmem:[%s5 + $0x8] sm:$0xf]
  %v377 = vld [vmem:[%s5 + $0xc] sm:$0xf]
  %v378 = vld [vmem:[%s5 + $0x10] sm:$0xf]
  %v379 = vld [vmem:[%s5 + $0x14] sm:$0xf]
  %v380 = vld [vmem:[%s5 + $0x18] sm:$0xf]
  %v381 = vld [vmem:[%s5 + $0x1c] sm:$0xf]
  %v382 = vld [vmem:[%s5 + $0x20] sm:$0xf]
  %v383 = vld [vmem:[%s5 + $0x24] sm:$0xf]
  %v384 = vld [vmem:[%s5 + $0x28] sm:$0xf]
  %v385 = vld [vmem:[%s5 + $0x2c] sm:$0xf]
  %v386 = vld [vmem:[%s5 + $0x30] sm:$0xf]
  %v387 = vld [vmem:[%s5 + $0x34] sm:$0xf]
  %v388 = vld [vmem:[%s5 + $0x38] sm:$0xf]
  %v389 = vld [vmem:[%s5 + $0x3c] sm:$0xf]
  %v390 = vld [vmem:[%s5 + $0x40] sm:$0xf]
  %v391 = vld [vmem:[%s5 + $0x44] sm:$0xf]
  %v392 = vld [vmem:[%s5 + $0x48] sm:$0xf]
  %v393 = vld [vmem:[%s5 + $0x4c] sm:$0xf]
  %v394 = vld [vmem:[%s5 + $0x50] sm:$0xf]
  %v395 = vld [vmem:[%s5 + $0x54] sm:$0xf]
  %v396 = vld [vmem:[%s5 + $0x58] sm:$0xf]
  %v397 = vld [vmem:[%s5 + $0x5c] sm:$0xf]
  %v398 = vld [vmem:[%s5 + $0x60] sm:$0xf]
  %v399 = vld [vmem:[%s5 + $0x64] sm:$0xf]
  %v400 = vld [vmem:[%s5 + $0x68] sm:$0xf]
  %v401 = vld [vmem:[%s5 + $0x6c] sm:$0xf]
  %v402 = vld [vmem:[%s5 + $0x70] sm:$0xf]
  %v403 = vld [vmem:[%s5 + $0x74] sm:$0xf]
  %v404 = vld [vmem:[%s5 + $0x78] sm:$0xf]
  %v405 = vld [vmem:[%s5 + $0x7c] sm:$0xf]
  %v406 = vld [vmem:[%s6] sm:$0x1]
  %v408 = vperm.slane %v406, 0
  %v442 = vunpack.c.l.b16 %v374
  %v443 = vunpack.c.l.b16 %v375
  %v444 = vunpack.c.l.b16 %v376
  %v445 = vunpack.c.l.b16 %v377
  %v446 = vunpack.c.l.b16 %v378
  %v447 = vunpack.c.l.b16 %v379
  %v448 = vunpack.c.l.b16 %v380
  %v449 = vunpack.c.l.b16 %v381
  %v450 = vunpack.c.l.b16 %v382
  %v451 = vunpack.c.l.b16 %v383
  %v452 = vunpack.c.l.b16 %v384
  %v453 = vunpack.c.l.b16 %v385
  %v454 = vunpack.c.l.b16 %v386
  %v455 = vunpack.c.l.b16 %v387
  %v456 = vunpack.c.l.b16 %v388
  %v457 = vunpack.c.l.b16 %v389
  %v458 = vunpack.c.l.b16 %v390
  %v459 = vunpack.c.l.b16 %v391
  %v460 = vunpack.c.l.b16 %v392
  %v461 = vunpack.c.l.b16 %v393
  %v462 = vunpack.c.l.b16 %v394
  %v463 = vunpack.c.l.b16 %v395
  %v464 = vunpack.c.l.b16 %v396
  %v465 = vunpack.c.l.b16 %v397
  %v466 = vunpack.c.l.b16 %v398
  %v467 = vunpack.c.l.b16 %v399
  %v468 = vunpack.c.l.b16 %v400
  %v469 = vunpack.c.l.b16 %v401
  %v470 = vunpack.c.l.b16 %v402
  %v471 = vunpack.c.l.b16 %v403
  %v472 = vunpack.c.l.b16 %v404
  %v473 = vunpack.c.l.b16 %v405
  %v474 = vpack.c.b16 %v443, %v442
  %v475 = vpack.c.b16 %v445, %v444
  %v476 = vpack.c.b16 %v447, %v446
  %v477 = vpack.c.b16 %v449, %v448
  %v478 = vpack.c.b16 %v451, %v450
  %v479 = vpack.c.b16 %v453, %v452
  %v480 = vpack.c.b16 %v455, %v454
  %v481 = vpack.c.b16 %v457, %v456
  %v482 = vpack.c.b16 %v459, %v458
  %v483 = vpack.c.b16 %v461, %v460
  %v484 = vpack.c.b16 %v463, %v462
  %v485 = vpack.c.b16 %v465, %v464
  %v486 = vpack.c.b16 %v467, %v466
  %v487 = vpack.c.b16 %v469, %v468
  %v488 = vpack.c.b16 %v471, %v470
  %v489 = vpack.c.b16 %v473, %v472
  %506 = vmatpush.bf16.msra.mxu0 %v481
  %507 = vmatpush.bf16.msra.mxu0 %v480
  %508 = vmatpush.bf16.msra.mxu0 %v479
  %509 = vmatpush.bf16.msra.mxu0 %v478
  %510 = vmatpush.bf16.msra.mxu0 %v477
  %511 = vmatpush.bf16.msra.mxu0 %v476
  %512 = vmatpush.bf16.msra.mxu0 %v475
  %513 = vmatpush.bf16.msra.mxu0 %v474
  %514 = vmatmul.bf16.gmra.mxu0 %v372
  %v515 = vpop.f32.mrf.mxu0
  %v516 = vadd.f32 %v408, %v515
  %v517 = vpop.f32.mrf.mxu0
  %v518 = vadd.f32 %v408, %v517
  %519 = vdwg.mxu0
  %520 = vmatpush.bf16.msra.mxu0 %v489
  %521 = vmatpush.bf16.msra.mxu0 %v488
  %522 = vmatpush.bf16.msra.mxu0 %v487
  %523 = vmatpush.bf16.msra.mxu0 %v486
  %524 = vmatpush.bf16.msra.mxu0 %v485
  %525 = vmatpush.bf16.msra.mxu0 %v484
  %526 = vmatpush.bf16.msra.mxu0 %v483
  %527 = vmatpush.bf16.msra.mxu0 %v482
  %528 = vmatmul.bf16.gmra.mxu0 %v373
  %v529 = vpop.f32.mrf.mxu0
  %v530 = vadd.f32 %v516, %v529
  %v531 = vpop.f32.mrf.mxu0
  %v532 = vadd.f32 %v518, %v531
  %533 = vdwg.mxu0
  %vm534 = vcmp.gt.f32.partialorder %v530, 20.0
  %vm535 = vcmp.gt.f32.partialorder %v532, 20.0
  %v536 = vmin.f32 %v530, 20.0
  %v537 = vmin.f32 %v532, 20.0
  %v538 = vmul.f32 %v536, 1.442695
  %v539 = vpow.pop %v538
  %v540 = vmul.f32 %v537, 1.442695
  %v541 = vpow.pop %v540
  %v542 = vadd.f32 %v539, 1.0
  %v543 = vlog2.pop %v542
  %v544 = vmul.f32 %v543, 0.6931472
  %v545 = vmul.f32 -0.5, %v539
  %v546 = vadd.f32 %v545, 1.0
  %v547 = vmul.f32 %v546, %v539
  %v548 = vand.u32 2147483647, %v539
  %vm549 = vcmp.lt.f32.partialorder %v548, 0.0004427343
  %v550 = vsel %vm549, %v547, %v544
  %v551 = vadd.f32 %v541, 1.0
  %v552 = vlog2.pop %v551
  %v553 = vmul.f32 %v552, 0.6931472
  %v554 = vmul.f32 -0.5, %v541
  %v555 = vadd.f32 %v554, 1.0
  %v556 = vmul.f32 %v555, %v541
  %v557 = vand.u32 2147483647, %v541
  %vm558 = vcmp.lt.f32.partialorder %v557, 0.0004427343
  %v559 = vsel %vm558, %v556, %v553
  %v560 = vsel %vm534, %v530, %v550
  %v561 = vsel %vm535, %v532, %v559
  %v562 = vadd.f32 %v560, 1e-05
  %v563 = vadd.f32 %v561, 1e-05
  %v564 = vlaneseq
  %v565 = vand.u32 %v564, 127
  %vm566 = vcmp.lt.s32.totalorder %v565, 16
  %v567 = vsel %vm566, %v530, %v562
  %v568 = vsel %vm566, %v532, %v563
  %569 = vst.msk [vmem:[%s7] sm:$0xff] %vm60, %v567
  %570 = vst.msk [vmem:[%s7 + $0x8] sm:$0xff] %vm60, %v568
  // Predicated region
  $region30: #{gaussian_forward.1} parent=0 // pred_check
    _
  $region31: #{gaussian_forward.1} parent=0 // pred_check_branch
    %572 = sbr.rel (0) target = $region33
  $region32: #{gaussian_forward.1} parent=0 // pred_region
    _
  $region33: #{gaussian_forward.1} parent=0 // pred_fallthru
    _
  // Predicated region
  $region34: #{gaussian_forward.1} parent=0 // pred_check
    _
  $region35: #{gaussian_forward.1} parent=0 // pred_check_branch
    %574 = sbr.rel (0) target = $region37
  $region36: #{gaussian_forward.1} parent=0 // pred_region
    _
  $region37: #{gaussian_forward.1} parent=0 // pred_fallthru
    _

</llo_original>
